<compile_context>
chip_gen: v5e
topology: v5e:2x2
jax: 0.10.0
libtpu: 0.0.40
codegen_flags: <defaults>
</compile_context>

<pallas_src>
import jax
import jax.numpy as jnp
from jax.experimental import pallas as pl
from jax.experimental.pallas import tpu as pltpu


def value_network_kernel(x_ref, w1_ref, b1_ref, w2_ref, b2_ref,
                         w3_ref, b3_ref, o_ref):
    x = x_ref[...]                                             # (TB, Sd) bf16
    # layer 1: Linear + ReLU  (MXU bf16 matmul, f32 accumulation)
    h1 = jnp.dot(x, w1_ref[...], preferred_element_type=jnp.float32) + b1_ref[...]
    h1 = jnp.maximum(h1, 0.0).astype(jnp.bfloat16)             # (TB, H)
    # layer 2: Linear + ReLU
    h2 = jnp.dot(h1, w2_ref[...], preferred_element_type=jnp.float32) + b2_ref[...]
    h2 = jnp.maximum(h2, 0.0).astype(jnp.bfloat16)             # (TB, H)
    # layer 3 (value head): contract w3 (1,H) against h2 (TB,H) over H
    # -> (1, TB): one lane per batch row (lane-dense store, no 1-lane output).
    v = jax.lax.dot_general(
        w3_ref[...], h2,
        dimension_numbers=(((1,), (1,)), ((), ())),
        preferred_element_type=jnp.float32)                    # (1, TB) f32
    o_ref[...] = (v + b3_ref[...]).astype(o_ref.dtype)


def _round_up(x, m):
    return ((x + m - 1) // m) * m


def value_network_forward(state, params, block_b=256):
    """state: [B, state_dim] f32.  Returns [B, 1] f32."""
    w1, b1, w2, b2, w3, b3 = params
    B, Sd = state.shape

    # Batch tile: multiple of 128 so the lane-dense (1, TB) value row fills
    # whole vregs; also a multiple of the bf16 sublane tile (16).
    TB = min(_round_up(block_b, 128), _round_up(B, 128))
    Bp = _round_up(B, TB)
    num_tiles = Bp // TB

    x = state.astype(jnp.bfloat16)                 # halve state DMA bytes
    if Bp != B:
        x = jnp.pad(x, ((0, Bp - B), (0, 0)))      # padded rows sliced off below

    pinned = lambda shape: pl.BlockSpec(shape, lambda i: (0, 0))

    out = pl.pallas_call(
        value_network_kernel,
        out_shape=jax.ShapeDtypeStruct((1, Bp), jnp.float32),
        grid=(num_tiles,),
        in_specs=[
            pl.BlockSpec((TB, Sd), lambda i: (i, 0)),   # per-tile state rows
            pinned(w1.shape), pinned(b1.shape),         # weights/bias: block index
            pinned(w2.shape), pinned(b2.shape),         #   constant -> VMEM-resident
            pinned(w3.shape), pinned(b3.shape),
        ],
        out_specs=pl.BlockSpec((1, TB), lambda i: (0, i)),  # lane-dense value row
        compiler_params=pltpu.CompilerParams(
            dimension_semantics=("parallel",),          # megacore batch split (v7x)
        ),
    )(x, w1, b1, w2, b2, w3, b3)

    return out[0, :B].reshape(B, 1)


def init_params(key, state_dim, hidden_dim, init_w=0.003):
    """Mirrors PyTorch nn.Linear defaults: uniform(+/-1/sqrt(fan_in)) for layers
    1-2, uniform(+/-init_w) for layer 3.  Weights stored [in, out] in bf16
    (layer-3 weight kept as the natural (1, hidden) row); biases f32."""
    k1, k2, k3, k4, k5, k6 = jax.random.split(key, 6)

    def unif(k, shape, bound):
        return jax.random.uniform(k, shape, jnp.float32, -bound, bound)

    bnd1 = float(state_dim) ** -0.5
    bnd2 = float(hidden_dim) ** -0.5

    w1 = unif(k1, (state_dim, hidden_dim), bnd1).astype(jnp.bfloat16)
    b1 = unif(k2, (1, hidden_dim), bnd1)
    w2 = unif(k3, (hidden_dim, hidden_dim), bnd2).astype(jnp.bfloat16)
    b2 = unif(k4, (1, hidden_dim), bnd2)
    w3 = unif(k5, (1, hidden_dim), init_w).astype(jnp.bfloat16)   # PyTorch [out=1, in]
    b3 = unif(k6, (1, 1), init_w)
    return (w1, b1, w2, b2, w3, b3)


def reference_forward(state, params):
    """Pure-JAX reference with the same bf16-operand / f32-accumulate math."""
    w1, b1, w2, b2, w3, b3 = params
    f32 = jnp.float32
    x = state.astype(jnp.bfloat16).astype(f32)
    h1 = jnp.maximum(x @ w1.astype(f32) + b1, 0.0)
    h1 = h1.astype(jnp.bfloat16).astype(f32)
    h2 = jnp.maximum(h1 @ w2.astype(f32) + b2, 0.0)
    h2 = h2.astype(jnp.bfloat16).astype(f32)
    return h2 @ w3.astype(f32).T + b3


if __name__ == "__main__":
    key = jax.random.PRNGKey(0)
    k_params, k_state = jax.random.split(key)

    batch = 200        # deliberately not a tile multiple -> exercises padding path
    state_dim = 24     # small stand-in for env.observation_space.shape[0]
    hidden_dim = 256   # production width (multiple of 128 -> full lane occupancy)

    params = init_params(k_params, state_dim, hidden_dim, init_w=0.003)
    state = jax.random.normal(k_state, (batch, state_dim), jnp.float32)

    out = value_network_forward(state, params, block_b=128)   # grid=(2,)
    out = jax.block_until_ready(out)

    ref = reference_forward(state, params)
    assert out.shape == (batch, 1), out.shape
    assert jnp.allclose(out, ref, atol=1e-4, rtol=1e-4), float(jnp.max(jnp.abs(out - ref)))

    print("KERNEL_OK")
</pallas_src>

<mosaic_0001>
module attributes {stable_mosaic.version = 11 : i64} {
  func.func @value_network_kernel(%arg0: i32, %arg1: memref<128x24xbf16, #tpu.memory_space<vmem>>, %arg2: memref<24x256xbf16, #tpu.memory_space<vmem>>, %arg3: memref<1x256xf32, #tpu.memory_space<vmem>>, %arg4: memref<256x256xbf16, #tpu.memory_space<vmem>>, %arg5: memref<1x256xf32, #tpu.memory_space<vmem>>, %arg6: memref<1x256xbf16, #tpu.memory_space<vmem>>, %arg7: memref<1x1xf32, #tpu.memory_space<vmem>>, %arg8: memref<1x128xf32, #tpu.memory_space<vmem>>) attributes {dimension_semantics = [#tpu.dimension_semantics<parallel>], iteration_bounds = array<i64: 2>, scalar_prefetch = 0 : i64, scratch_operands = 0 : i64, tpu.core_type = #tpu.core_type<tc>, window_params = [{transform_indices = @transform_0, window_bounds = array<i64: 128, 24>}, {pipeline_mode = #tpu.pipeline_mode<synchronous>, transform_indices = @transform_1, window_bounds = array<i64: 24, 256>}, {pipeline_mode = #tpu.pipeline_mode<synchronous>, transform_indices = @transform_2, window_bounds = array<i64: 1, 256>}, {pipeline_mode = #tpu.pipeline_mode<synchronous>, transform_indices = @transform_3, window_bounds = array<i64: 256, 256>}, {pipeline_mode = #tpu.pipeline_mode<synchronous>, transform_indices = @transform_4, window_bounds = array<i64: 1, 256>}, {pipeline_mode = #tpu.pipeline_mode<synchronous>, transform_indices = @transform_5, window_bounds = array<i64: 1, 256>}, {pipeline_mode = #tpu.pipeline_mode<synchronous>, transform_indices = @transform_6, window_bounds = array<i64: 1, 1>}, {transform_indices = @transform_7, window_bounds = array<i64: 1, 128>}]} {
    %c0 = arith.constant 0 : index
    %c0_0 = arith.constant 0 : index
    %0 = vector.load %arg1[%c0, %c0_0] : memref<128x24xbf16, #tpu.memory_space<vmem>>, vector<128x24xbf16>
    %c0_1 = arith.constant 0 : index
    %c0_2 = arith.constant 0 : index
    %1 = vector.load %arg2[%c0_1, %c0_2] : memref<24x256xbf16, #tpu.memory_space<vmem>>, vector<24x256xbf16>
    %cst = arith.constant dense<0.000000e+00> : vector<128x256xf32>
    %2 = tpu.matmul %0, %1, %cst {dimension_numbers = #tpu.dot_dimension_numbers<[1], [0], [0], [1], [0, 0, 1, 1], [], []>} : vector<128x24xbf16>, vector<24x256xbf16>, vector<128x256xf32> -> vector<128x256xf32>
    %c0_3 = arith.constant 0 : index
    %c0_4 = arith.constant 0 : index
    %3 = vector.load %arg3[%c0_3, %c0_4] : memref<1x256xf32, #tpu.memory_space<vmem>>, vector<1x256xf32>
    %4 = vector.broadcast %3 : vector<1x256xf32> to vector<128x256xf32>
    %5 = arith.addf %2, %4 : vector<128x256xf32>
    %cst_5 = arith.constant 0.000000e+00 : f32
    %6 = vector.broadcast %cst_5 : f32 to vector<128x256xf32>
    %7 = arith.maximumf %5, %6 : vector<128x256xf32>
    %8 = arith.truncf %7 : vector<128x256xf32> to vector<128x256xbf16>
    %c0_6 = arith.constant 0 : index
    %c0_7 = arith.constant 0 : index
    %9 = vector.load %arg4[%c0_6, %c0_7] : memref<256x256xbf16, #tpu.memory_space<vmem>>, vector<256x256xbf16>
    %cst_8 = arith.constant dense<0.000000e+00> : vector<128x256xf32>
    %10 = tpu.matmul %8, %9, %cst_8 {dimension_numbers = #tpu.dot_dimension_numbers<[1], [0], [0], [1], [0, 0, 1, 1], [], []>} : vector<128x256xbf16>, vector<256x256xbf16>, vector<128x256xf32> -> vector<128x256xf32>
    %c0_9 = arith.constant 0 : index
    %c0_10 = arith.constant 0 : index
    %11 = vector.load %arg5[%c0_9, %c0_10] : memref<1x256xf32, #tpu.memory_space<vmem>>, vector<1x256xf32>
    %12 = vector.broadcast %11 : vector<1x256xf32> to vector<128x256xf32>
    %13 = arith.addf %10, %12 : vector<128x256xf32>
    %cst_11 = arith.constant 0.000000e+00 : f32
    %14 = vector.broadcast %cst_11 : f32 to vector<128x256xf32>
    %15 = arith.maximumf %13, %14 : vector<128x256xf32>
    %16 = arith.truncf %15 : vector<128x256xf32> to vector<128x256xbf16>
    %c0_12 = arith.constant 0 : index
    %c0_13 = arith.constant 0 : index
    %17 = vector.load %arg6[%c0_12, %c0_13] : memref<1x256xbf16, #tpu.memory_space<vmem>>, vector<1x256xbf16>
    %cst_14 = arith.constant dense<0.000000e+00> : vector<1x128xf32>
    %18 = tpu.matmul %17, %16, %cst_14 {dimension_numbers = #tpu.dot_dimension_numbers<[1], [1], [0], [0], [0, 0, 1, 0], [], []>} : vector<1x256xbf16>, vector<128x256xbf16>, vector<1x128xf32> -> vector<1x128xf32>
    %c0_15 = arith.constant 0 : index
    %c0_16 = arith.constant 0 : index
    %19 = vector.load %arg7[%c0_15, %c0_16] : memref<1x1xf32, #tpu.memory_space<vmem>>, vector<1x1xf32>
    %20 = vector.broadcast %19 : vector<1x1xf32> to vector<1x128xf32>
    %21 = arith.addf %18, %20 : vector<1x128xf32>
    %c0_17 = arith.constant 0 : index
    %c0_18 = arith.constant 0 : index
    %22 = vector.load %arg8[%c0_17, %c0_18] : memref<1x128xf32, #tpu.memory_space<vmem>>, vector<1x128xf32>
    tpu.vector_store %arg8[%c0_17, %c0_18], %21 {strides = array<i32>} : memref<1x128xf32, #tpu.memory_space<vmem>>, vector<1x128xf32>,
    return
  }
  func.func @transform_0(%arg0: i32) -> (i32, i32) {
    %c0_i32 = arith.constant 0 : i32
    %c0_i32_0 = arith.constant 0 : i32
    return %arg0, %c0_i32 : i32, i32
  }
  func.func @transform_1(%arg0: i32) -> (i32, i32) {
    %c0_i32 = arith.constant 0 : i32
    %c0_i32_0 = arith.constant 0 : i32
    %c0_i32_1 = arith.constant 0 : i32
    return %c0_i32, %c0_i32_0 : i32, i32
  }
  func.func @transform_2(%arg0: i32) -> (i32, i32) {
    %c0_i32 = arith.constant 0 : i32
    %c0_i32_0 = arith.constant 0 : i32
    %c0_i32_1 = arith.constant 0 : i32
    return %c0_i32, %c0_i32_0 : i32, i32
  }
  func.func @transform_3(%arg0: i32) -> (i32, i32) {
    %c0_i32 = arith.constant 0 : i32
    %c0_i32_0 = arith.constant 0 : i32
    %c0_i32_1 = arith.constant 0 : i32
    return %c0_i32, %c0_i32_0 : i32, i32
  }
  func.func @transform_4(%arg0: i32) -> (i32, i32) {
    %c0_i32 = arith.constant 0 : i32
    %c0_i32_0 = arith.constant 0 : i32
    %c0_i32_1 = arith.constant 0 : i32
    return %c0_i32, %c0_i32_0 : i32, i32
  }
  func.func @transform_5(%arg0: i32) -> (i32, i32) {
    %c0_i32 = arith.constant 0 : i32
    %c0_i32_0 = arith.constant 0 : i32
    %c0_i32_1 = arith.constant 0 : i32
    return %c0_i32, %c0_i32_0 : i32, i32
  }
  func.func @transform_6(%arg0: i32) -> (i32, i32) {
    %c0_i32 = arith.constant 0 : i32
    %c0_i32_0 = arith.constant 0 : i32
    %c0_i32_1 = arith.constant 0 : i32
    return %c0_i32, %c0_i32_0 : i32, i32
  }
  func.func @transform_7(%arg0: i32) -> (i32, i32) {
    %c0_i32 = arith.constant 0 : i32
    %c0_i32_0 = arith.constant 0 : i32
    return %c0_i32, %arg0 : i32, i32
  }
}

</mosaic_0001>

<llo_original>
// kernel: tpu_custom_call.1
$region0: #{tpu_custom_call.1}
  #allocation0 [shape = 'u32[]', space=smem, size = 0x4, offset = 0x4, fixed_abs, tag = 'smem constant byte address 0x4 - core index']
  #allocation1 [shape = 'u32[72,128]{1,0:T(1,128)}', space=vmem, size = 0x9000, scoped, tag = 'internal scratch']
  #allocation2 [shape = 'f32[1,1]{1,0:T(1,128)S(1)}', space=vmem, size = 0x200, scoped, tag = 'scoped memory for tpu_custom_call.1']
  %s0 = inlined_call_operand.vmem [shape: bf16[256,24], index: 0, kind: input, shape index: {}]
  %s1 = inlined_call_operand.vmem [shape: bf16[24,256], index: 1, kind: input, shape index: {}]
  %s2 = inlined_call_operand.vmem [shape: f32[1,256], index: 2, kind: input, shape index: {}]
  %s3 = inlined_call_operand.hbm [shape: bf16[256,256], index: 3, kind: input, shape index: {}]
  %s4 = inlined_call_operand.vmem [shape: f32[1,256], index: 4, kind: input, shape index: {}]
  %s5 = inlined_call_operand.vmem [shape: bf16[1,256], index: 5, kind: input, shape index: {}]
  %s6 = inlined_call_operand.<no memory space> [shape: f32[1,1], index: 6, kind: input, shape index: {}]
  %s7 = inlined_call_operand.hbm [shape: f32[1,256], index: 7, kind: output, shape index: {}]
  %s8 = sld [smem:[#allocation0]]
  $region65: #{tpu_custom_call.1} parent=0
    _
  %s10 = ssub.s32 1, %s8
  %s11 = scalar_select 0, %s10, %s8
  %v12 = vstv %s6
  %13 = vst [vmem:[#allocation2] sm:$0x1] %v12
  $region1: #{tpu_custom_call.1} parent=0
    #allocation3 [shape = 'u8[131072]{0}', space=vmem, size = 0x20000, scoped, tag = 'input window, operand 3, single buffered']
    #allocation4 [shape = 's32[2]{0}', space=sflag, size = 0x8, scoped, tag = 'scoped memory for tpu_custom_call.1']
    #allocation5 [shape = 's32[2]{0}', space=sflag, size = 0x8, scoped, tag = 'scoped memory for tpu_custom_call.1']
    #allocation6 [shape = 'u8[1024]{0}', space=vmem, size = 0x400, scoped, tag = 'output window, operand 0']
    %14 = vsyncpa [#allocation4], 0
    %15 = vsyncpa [#allocation5], 0
    %s16 = scalar_lea.sflag [#allocation5], 1
    %17 = vsyncpa %s16, 0
    loop: start=0, step=1, limit=4
    $region2: #{tpu_custom_call.1} parent=1 // loop_pre_header
      _
    $region3: #{tpu_custom_call.1} parent=1 // loop_header
      %s19 = sphi 0, %s23
      %p20 = scmp.ge.s32.totalorder %s19, 4
      %s29 = sphi 0, %s31
      %s32 = sphi 0, %s29
      %s33 = sphi 0, %s32
      %s49 = sphi 0, %s33
      %s53 = sphi 0, %s53
      %s55 = sphi 0, %s53
      %s56 = sphi 0, %s55
      %s70 = sphi 0, %s56
      %s74 = sphi 0, %s74
      %s76 = sphi 0, %s74
      %s77 = sphi 0, %s76
      %s91 = sphi 0, %s77
      %s95 = sphi 0, %s95
      %s97 = sphi 0, %s95
      %s98 = sphi 0, %s97
      %s112 = sphi 0, %s98
      %s116 = sphi 0, %s116
      %s118 = sphi 0, %s116
      %s119 = sphi 0, %s118
      %s133 = sphi 0, %s119
      %s137 = sphi 0, %s137
      %s139 = sphi 0, %s137
      %s140 = sphi 0, %s139
      %s154 = sphi 0, %s140
      %s158 = sphi 0, %s158
      %s160 = sphi 0, %s158
      %s161 = sphi 0, %s160
      %s175 = sphi 0, %s161
      %s181 = sphi 0, %s183
      %s184 = sphi 0, %s181
      %s185 = sphi 0, %s184
      %s201 = sphi 0, %s185
    $region4: #{tpu_custom_call.1} parent=1 // loop_header_branch
      %22 = sbr.rel (%p20) target = $region8
    $region5: #{tpu_custom_call.1} parent=1 // loop_body
      %s24 = ssub.s32 %s19, 1
      %s25 = ssub.s32 %s19, 2
      %s26 = sadd.s32 %s19, 1
      %s27 = ssub.s32 %s19, %s26
      %p28 = scmp.eq.s32.totalorder %s27, 0
      %s30 = sadd.s32 %s29, 1
      %s31 = scalar_select %p28, %s29, %s30
      %p34 = pneg %p28
      %p35 = scmp.eq.s32.totalorder %s19, 1
      %p36 = por %p34, %p35
      %p37 = scmp.ne.s32.totalorder %s29, %s32
      %p38 = scmp.eq.s32.totalorder %s19, 0
      %p39 = por %p37, %p38
      %p40 = scmp.ne.s32.totalorder %s29, %s32
      %p41 = scmp.eq.s32.totalorder %s24, 1
      %p42 = por %p40, %p41
      %p43 = scmp.ne.s32.totalorder %s32, %s33
      %p44 = scmp.eq.s32.totalorder %s24, 0
      %p45 = por %p43, %p44
      %p46 = scmp.ne.s32.totalorder %s32, %s33
      %p47 = scmp.eq.s32.totalorder %s25, 1
      %p48 = por %p46, %p47
      %p50 = scmp.ne.s32.totalorder %s33, %s49
      %p51 = scmp.eq.s32.totalorder %s25, 0
      %p52 = por %p50, %p51
      %s54 = sadd.s32 %s53, 1
      %p57 = scmp.eq.s32.totalorder %s19, 1
      %p58 = scmp.ne.s32.totalorder %s53, %s55
      %p59 = scmp.eq.s32.totalorder %s19, 0
      %p60 = por %p58, %p59
      %p61 = scmp.ne.s32.totalorder %s53, %s55
      %p62 = scmp.eq.s32.totalorder %s24, 1
      %p63 = por %p61, %p62
      %p64 = scmp.ne.s32.totalorder %s55, %s56
      %p65 = scmp.eq.s32.totalorder %s24, 0
      %p66 = por %p64, %p65
      %p67 = scmp.ne.s32.totalorder %s55, %s56
      %p68 = scmp.eq.s32.totalorder %s25, 1
      %p69 = por %p67, %p68
      %p71 = scmp.ne.s32.totalorder %s56, %s70
      %p72 = scmp.eq.s32.totalorder %s25, 0
      %p73 = por %p71, %p72
      %s75 = sadd.s32 %s74, 1
      %p78 = scmp.eq.s32.totalorder %s19, 1
      %p79 = scmp.ne.s32.totalorder %s74, %s76
      %p80 = scmp.eq.s32.totalorder %s19, 0
      %p81 = por %p79, %p80
      %p82 = scmp.ne.s32.totalorder %s74, %s76
      %p83 = scmp.eq.s32.totalorder %s24, 1
      %p84 = por %p82, %p83
      %p85 = scmp.ne.s32.totalorder %s76, %s77
      %p86 = scmp.eq.s32.totalorder %s24, 0
      %p87 = por %p85, %p86
      %p88 = scmp.ne.s32.totalorder %s76, %s77
      %p89 = scmp.eq.s32.totalorder %s25, 1
      %p90 = por %p88, %p89
      %p92 = scmp.ne.s32.totalorder %s77, %s91
      %p93 = scmp.eq.s32.totalorder %s25, 0
      %p94 = por %p92, %p93
      %s96 = sadd.s32 %s95, 1
      %p99 = scmp.eq.s32.totalorder %s19, 1
      %p100 = scmp.ne.s32.totalorder %s95, %s97
      %p101 = scmp.eq.s32.totalorder %s19, 0
      %p102 = por %p100, %p101
      %p103 = scmp.ne.s32.totalorder %s95, %s97
      %p104 = scmp.eq.s32.totalorder %s24, 1
      %p105 = por %p103, %p104
      %p106 = scmp.ne.s32.totalorder %s97, %s98
      %p107 = scmp.eq.s32.totalorder %s24, 0
      %p108 = por %p106, %p107
      %p109 = scmp.ne.s32.totalorder %s97, %s98
      %p110 = scmp.eq.s32.totalorder %s25, 1
      %p111 = por %p109, %p110
      %p113 = scmp.ne.s32.totalorder %s98, %s112
      %p114 = scmp.eq.s32.totalorder %s25, 0
      %p115 = por %p113, %p114
      %s117 = sadd.s32 %s116, 1
      %p120 = scmp.eq.s32.totalorder %s19, 1
      %p121 = scmp.ne.s32.totalorder %s116, %s118
      %p122 = scmp.eq.s32.totalorder %s19, 0
      %p123 = por %p121, %p122
      %p124 = scmp.ne.s32.totalorder %s116, %s118
      %p125 = scmp.eq.s32.totalorder %s24, 1
      %p126 = por %p124, %p125
      %p127 = scmp.ne.s32.totalorder %s118, %s119
      %p128 = scmp.eq.s32.totalorder %s24, 0
      %p129 = por %p127, %p128
      %p130 = scmp.ne.s32.totalorder %s118, %s119
      %p131 = scmp.eq.s32.totalorder %s25, 1
      %p132 = por %p130, %p131
      %p134 = scmp.ne.s32.totalorder %s119, %s133
      %p135 = scmp.eq.s32.totalorder %s25, 0
      %p136 = por %p134, %p135
      %s138 = sadd.s32 %s137, 1
      %p141 = scmp.eq.s32.totalorder %s19, 1
      %p142 = scmp.ne.s32.totalorder %s137, %s139
      %p143 = scmp.eq.s32.totalorder %s19, 0
      %p144 = por %p142, %p143
      %p145 = scmp.ne.s32.totalorder %s137, %s139
      %p146 = scmp.eq.s32.totalorder %s24, 1
      %p147 = por %p145, %p146
      %p148 = scmp.ne.s32.totalorder %s139, %s140
      %p149 = scmp.eq.s32.totalorder %s24, 0
      %p150 = por %p148, %p149
      %p151 = scmp.ne.s32.totalorder %s139, %s140
      %p152 = scmp.eq.s32.totalorder %s25, 1
      %p153 = por %p151, %p152
      %p155 = scmp.ne.s32.totalorder %s140, %s154
      %p156 = scmp.eq.s32.totalorder %s25, 0
      %p157 = por %p155, %p156
      %s159 = sadd.s32 %s158, 1
      %p162 = scmp.eq.s32.totalorder %s19, 1
      %p163 = scmp.ne.s32.totalorder %s158, %s160
      %p164 = scmp.eq.s32.totalorder %s19, 0
      %p165 = por %p163, %p164
      %p166 = scmp.ne.s32.totalorder %s158, %s160
      %p167 = scmp.eq.s32.totalorder %s24, 1
      %p168 = por %p166, %p167
      %p169 = scmp.ne.s32.totalorder %s160, %s161
      %p170 = scmp.eq.s32.totalorder %s24, 0
      %p171 = por %p169, %p170
      %p172 = scmp.ne.s32.totalorder %s160, %s161
      %p173 = scmp.eq.s32.totalorder %s25, 1
      %p174 = por %p172, %p173
      %p176 = scmp.ne.s32.totalorder %s161, %s175
      %p177 = scmp.eq.s32.totalorder %s25, 0
      %p178 = por %p176, %p177
      %s179 = ssub.s32 %s19, %s26
      %p180 = scmp.eq.s32.totalorder %s179, 0
      %s182 = sadd.s32 %s181, 1
      %s183 = scalar_select %p180, %s181, %s182
      %p186 = pneg %p180
      %p187 = scmp.eq.s32.totalorder %s19, 1
      %p188 = por %p186, %p187
      %p189 = scmp.ne.s32.totalorder %s181, %s184
      %p190 = scmp.eq.s32.totalorder %s19, 0
      %p191 = por %p189, %p190
      %p192 = scmp.ne.s32.totalorder %s181, %s184
      %p193 = scmp.eq.s32.totalorder %s24, 1
      %p194 = por %p192, %p193
      %p195 = scmp.ne.s32.totalorder %s184, %s185
      %p196 = scmp.eq.s32.totalorder %s24, 0
      %p197 = por %p195, %p196
      %p198 = scmp.ne.s32.totalorder %s184, %s185
      %p199 = scmp.eq.s32.totalorder %s25, 1
      %p200 = por %p198, %p199
      %p202 = scmp.ne.s32.totalorder %s185, %s201
      %p203 = scmp.eq.s32.totalorder %s25, 0
      %p204 = por %p202, %p203
      %p205 = scmp.le.s32.totalorder 1, %s19
      %p206 = scmp.lt.s32.totalorder %s19, 3
      %p207 = pnand %p205, %p206
      %p208 = pneg %p207
      // Predicated region
      $region9: #{tpu_custom_call.1} parent=5 // pred_check
        _
      $region10: #{tpu_custom_call.1} parent=5 // pred_check_branch
        %210 = sbr.rel (%p207) target = $region12
      $region11: #{tpu_custom_call.1} parent=5 // pred_region
        %s211 = ssub.s32 %s19, 1
        // Predicated region
        $region13: #{tpu_custom_call.1} parent=11 // pred_check
          %p212 = pneg %p66
        $region14: #{tpu_custom_call.1} parent=11 // pred_check_branch
          %214 = sbr.rel (%p212) target = $region16
        $region15: #{tpu_custom_call.1} parent=11 // pred_region
          _
        $region16: #{tpu_custom_call.1} parent=11 // pred_fallthru
          _
        // Predicated region
        $region17: #{tpu_custom_call.1} parent=11 // pred_check
          %p215 = pneg %p87
        $region18: #{tpu_custom_call.1} parent=11 // pred_check_branch
          %217 = sbr.rel (%p215) target = $region20
        $region19: #{tpu_custom_call.1} parent=11 // pred_region
          _
        $region20: #{tpu_custom_call.1} parent=11 // pred_fallthru
          _
        // Predicated region
        $region21: #{tpu_custom_call.1} parent=11 // pred_check
          %p218 = pneg %p108
        $region22: #{tpu_custom_call.1} parent=11 // pred_check_branch
          %220 = sbr.rel (%p218) target = $region24
        $region23: #{tpu_custom_call.1} parent=11 // pred_region
          %222 = vsyncadd [#allocation4], 0
          %s223 = sshll.u32 %s3, 4
          %s224 = int_to_ptr.hbm [resolvable:$true] %s223
          %s225 = sshll.u32 [#allocation3], 4
          %s226 = int_to_ptr.vmem [resolvable:$true] %s225
          %231 = dma.hbm_to_vmem [thread:$0]  %s224, 4096, %s226, [#allocation4], 128, 128, 8
        $region24: #{tpu_custom_call.1} parent=11 // pred_fallthru
          _
        // Predicated region
        $region25: #{tpu_custom_call.1} parent=11 // pred_check
          %p232 = pneg %p129
        $region26: #{tpu_custom_call.1} parent=11 // pred_check_branch
          %234 = sbr.rel (%p232) target = $region28
        $region27: #{tpu_custom_call.1} parent=11 // pred_region
          _
        $region28: #{tpu_custom_call.1} parent=11 // pred_fallthru
          _
        // Predicated region
        $region29: #{tpu_custom_call.1} parent=11 // pred_check
          %p235 = pneg %p150
        $region30: #{tpu_custom_call.1} parent=11 // pred_check_branch
          %237 = sbr.rel (%p235) target = $region32
        $region31: #{tpu_custom_call.1} parent=11 // pred_region
          _
        $region32: #{tpu_custom_call.1} parent=11 // pred_fallthru
          _
        // Predicated region
        $region33: #{tpu_custom_call.1} parent=11 // pred_check
          %p238 = pneg %p171
        $region34: #{tpu_custom_call.1} parent=11 // pred_check_branch
          %240 = sbr.rel (%p238) target = $region36
        $region35: #{tpu_custom_call.1} parent=11 // pred_region
          _
        $region36: #{tpu_custom_call.1} parent=11 // pred_fallthru
          _
      $region12: #{tpu_custom_call.1} parent=5 // pred_fallthru
        _
      %p241 = scmp.lt.s32.totalorder %s19, 2
      // Predicated region
      $region37: #{tpu_custom_call.1} parent=5 // pred_check
        %p242 = pneg %p241
      $region38: #{tpu_custom_call.1} parent=5 // pred_check_branch
        %244 = sbr.rel (%p242) target = $region40
      $region39: #{tpu_custom_call.1} parent=5 // pred_region
        // Predicated region
        $region41: #{tpu_custom_call.1} parent=39 // pred_check
          %p245 = pneg %p39
        $region42: #{tpu_custom_call.1} parent=39 // pred_check_branch
          %247 = sbr.rel (%p245) target = $region44
        $region43: #{tpu_custom_call.1} parent=39 // pred_region
          %s248 = smul.u32 16, %s19
          %p249 = scmp.lt.s32.totalorder %s248, 31
          %s250 = scalar_select %p249, %s248, 31
          %s251 = smul.addr %s250, 4
          %s252 = scalar_lea.vmem %s0, %s251
          %s253 = smul.u32 16, %s19
        $region44: #{tpu_custom_call.1} parent=39 // pred_fallthru
          _
      $region40: #{tpu_custom_call.1} parent=5 // pred_fallthru
        _
      %p254 = scmp.le.s32.totalorder 1, %s19
      %p255 = scmp.lt.s32.totalorder %s19, 3
      %p256 = pnand %p254, %p255
      %p257 = pneg %p256
      // Predicated region
      $region45: #{tpu_custom_call.1} parent=5 // pred_check
        _
      $region46: #{tpu_custom_call.1} parent=5 // pred_check_branch
        %259 = sbr.rel (%p256) target = $region48
      $region47: #{tpu_custom_call.1} parent=5 // pred_region
        %s260 = ssub.s32 %s19, 1
        // Predicated region
        $region49: #{tpu_custom_call.1} parent=47 // pred_check
          %p261 = pneg %p108
        $region50: #{tpu_custom_call.1} parent=47 // pred_check_branch
          %263 = sbr.rel (%p261) target = $region52
        $region51: #{tpu_custom_call.1} parent=47 // pred_region
          %265 = dma.done [#allocation4], 4096
        $region52: #{tpu_custom_call.1} parent=47 // pred_fallthru
          _
        %s266 = smul.u32 16, %s24
        %p267 = scmp.lt.s32.totalorder %s266, 31
        %s268 = scalar_select %p267, %s266, 31
        %s269 = smul.addr %s268, 4
        %s270 = scalar_lea.vmem %s0, %s269
        %p271 = pneg %p45
        %p272 = pneg %p42
        %p273 = pneg %p66
        %p274 = pneg %p63
        %p275 = pneg %p87
        %p276 = pneg %p84
        %p277 = pneg %p108
        %p278 = pneg %p105
        %p279 = pneg %p129
        %p280 = pneg %p126
        %p281 = pneg %p150
        %p282 = pneg %p147
        %p283 = pneg %p171
        %p284 = pneg %p168
        %p285 = pneg %p197
        %p286 = pneg %p194
        %s287 = sand.u32 %s184, 1
        %s288 = scalar_lea.sflag [#allocation5], %s287
        %s289 = sand.u32 %s184, 1
        %s290 = scalar_lea.vmem [#allocation6], %s289
        %s291 = smul.u32 16, %s24
        %p292 = scmp.lt.s32.totalorder %s291, 31
        %s293 = scalar_select %p292, %s291, 31
        %s294 = smul.addr %s293, 4
        %s295 = scalar_lea.vmem %s0, %s294
        %s296 = smul.u32 16, %s24
        %v298 = vld [vmem:[%s295] sm:$0xf]
        %v299 = vld [vmem:[%s295 + $0x4] sm:$0xf]
        %v300 = vld [vmem:[%s295 + $0x8] sm:$0xf]
        %v301 = vld [vmem:[%s295 + $0xc] sm:$0xf]
        %v302 = vld [vmem:[%s295 + $0x10] sm:$0xf]
        %v303 = vld [vmem:[%s295 + $0x14] sm:$0xf]
        %v304 = vld [vmem:[%s295 + $0x18] sm:$0xf]
        %v305 = vld [vmem:[%s295 + $0x1c] sm:$0xf]
        %v306 = vld [vmem:[%s295 + $0x20] sm:$0xf]
        %v307 = vld [vmem:[%s295 + $0x24] sm:$0xf]
        %v308 = vld [vmem:[%s295 + $0x28] sm:$0xf]
        %v309 = vld [vmem:[%s295 + $0x2c] sm:$0xf]
        %v310 = vld [vmem:[%s295 + $0x30] sm:$0xf]
        %v311 = vld [vmem:[%s295 + $0x34] sm:$0xf]
        %v312 = vld [vmem:[%s295 + $0x38] sm:$0xf]
        %v313 = vld [vmem:[%s295 + $0x3c] sm:$0xf]
        %v314 = vld [vmem:[%s1] sm:$0xff]
        %v315 = vld [vmem:[%s1 + $0x8] sm:$0xff]
        %v316 = vld [vmem:[%s1 + $0x10] sm:$0xff]
        %v317 = vld [vmem:[%s2] sm:$0x3]
        %v319 = vperm.slane %v317, 0
        %v320 = vperm.slane %v317, 1
        %v339 = vunpack.c.l.b16 %v298
        %v340 = vunpack.c.l.b16 %v299
        %v341 = vunpack.c.l.b16 %v300
        %v342 = vunpack.c.l.b16 %v301
        %v343 = vunpack.c.l.b16 %v302
        %v344 = vunpack.c.l.b16 %v303
        %v345 = vunpack.c.l.b16 %v304
        %v346 = vunpack.c.l.b16 %v305
        %v347 = vunpack.c.l.b16 %v306
        %v348 = vunpack.c.l.b16 %v307
        %v349 = vunpack.c.l.b16 %v308
        %v350 = vunpack.c.l.b16 %v309
        %v351 = vunpack.c.l.b16 %v310
        %v352 = vunpack.c.l.b16 %v311
        %v353 = vunpack.c.l.b16 %v312
        %v354 = vunpack.c.l.b16 %v313
        %v355 = vpack.c.b16 %v340, %v339
        %v356 = vpack.c.b16 %v342, %v341
        %v357 = vpack.c.b16 %v344, %v343
        %v358 = vpack.c.b16 %v346, %v345
        %v359 = vpack.c.b16 %v348, %v347
        %v360 = vpack.c.b16 %v350, %v349
        %v361 = vpack.c.b16 %v352, %v351
        %v362 = vpack.c.b16 %v354, %v353
        %v366 = vunpack.c.l.b16 %v314
        %v367 = vunpack.c.h.b16 %v314
        %v368 = vunpack.c.l.b16 %v315
        %v369 = vunpack.c.h.b16 %v315
        %v370 = vunpack.c.l.b16 %v316
        %v371 = vunpack.c.h.b16 %v316
        %v372 = vpack.c.b16 %v368, %v366
        %v373 = vpack.c.b16 %v369, %v367
        %v374 = vpack.c.b16 %v370, %v370
        %v375 = vpack.c.b16 %v371, %v371
        %vm378 = vcmask 195584
        %v380 = vsel %vm378, %v355, 0
        %v383 = vsel %vm378, %v356, 0
        %v386 = vsel %vm378, %v357, 0
        %v389 = vsel %vm378, %v358, 0
        %v392 = vsel %vm378, %v359, 0
        %v395 = vsel %vm378, %v360, 0
        %v398 = vsel %vm378, %v361, 0
        %v401 = vsel %vm378, %v362, 0
        %vm403 = vcmask 1043456
        %v405 = vsel %vm403, %v374, 0
        %v408 = vsel %vm403, %v375, 0
        %410 = vmatpush.bf16.msra.mxu0 0
        %411 = vmatpush.bf16.msra.mxu0 0
        %412 = vmatpush.bf16.msra.mxu0 0
        %413 = vmatpush.bf16.msra.mxu0 0
        %414 = vmatpush.bf16.msra.mxu0 0
        %415 = vmatpush.bf16.msra.mxu0 0
        %416 = vmatpush.bf16.msra.mxu0 %v405
        %417 = vmatpush.bf16.msra.mxu0 %v372
        %418 = vmatmul.bf16.gmra.mxu0 %v380
        %v419 = vpop.f32.mrf.mxu0
        %v420 = vadd.f32 %v319, %v419
        %v421 = vpop.f32.mrf.mxu0
        %v422 = vadd.f32 %v319, %v421
        %423 = vmatmul.bf16.gmra.mxu0 %v383
        %v424 = vpop.f32.mrf.mxu0
        %v425 = vadd.f32 %v319, %v424
        %v426 = vpop.f32.mrf.mxu0
        %v427 = vadd.f32 %v319, %v426
        %428 = vmatmul.bf16.gmra.mxu0 %v386
        %v429 = vpop.f32.mrf.mxu0
        %v430 = vadd.f32 %v319, %v429
        %v431 = vpop.f32.mrf.mxu0
        %v432 = vadd.f32 %v319, %v431
        %433 = vmatmul.bf16.gmra.mxu0 %v389
        %v434 = vpop.f32.mrf.mxu0
        %v435 = vadd.f32 %v319, %v434
        %v436 = vpop.f32.mrf.mxu0
        %v437 = vadd.f32 %v319, %v436
        %438 = vmatmul.bf16.gmra.mxu0 %v392
        %v439 = vpop.f32.mrf.mxu0
        %v440 = vadd.f32 %v319, %v439
        %v441 = vpop.f32.mrf.mxu0
        %v442 = vadd.f32 %v319, %v441
        %443 = vmatmul.bf16.gmra.mxu0 %v395
        %v444 = vpop.f32.mrf.mxu0
        %v445 = vadd.f32 %v319, %v444
        %v446 = vpop.f32.mrf.mxu0
        %v447 = vadd.f32 %v319, %v446
        %448 = vmatmul.bf16.gmra.mxu0 %v398
        %v449 = vpop.f32.mrf.mxu0
        %v450 = vadd.f32 %v319, %v449
        %v451 = vpop.f32.mrf.mxu0
        %v452 = vadd.f32 %v319, %v451
        %453 = vmatmul.bf16.gmra.mxu0 %v401
        %v454 = vpop.f32.mrf.mxu0
        %v455 = vadd.f32 %v319, %v454
        %v456 = vpop.f32.mrf.mxu0
        %v457 = vadd.f32 %v319, %v456
        %458 = vdwg.mxu0
        %459 = vmatpush.bf16.msra.mxu0 0
        %460 = vmatpush.bf16.msra.mxu0 0
        %461 = vmatpush.bf16.msra.mxu0 0
        %462 = vmatpush.bf16.msra.mxu0 0
        %463 = vmatpush.bf16.msra.mxu0 0
        %464 = vmatpush.bf16.msra.mxu0 0
        %465 = vmatpush.bf16.msra.mxu0 %v408
        %466 = vmatpush.bf16.msra.mxu0 %v373
        %467 = vmatmul.bf16.gmra.mxu0 %v380
        %v468 = vpop.f32.mrf.mxu0
        %v469 = vadd.f32 %v320, %v468
        %v470 = vpop.f32.mrf.mxu0
        %v471 = vadd.f32 %v320, %v470
        %472 = vmatmul.bf16.gmra.mxu0 %v383
        %v473 = vpop.f32.mrf.mxu0
        %v474 = vadd.f32 %v320, %v473
        %v475 = vpop.f32.mrf.mxu0
        %v476 = vadd.f32 %v320, %v475
        %477 = vmatmul.bf16.gmra.mxu0 %v386
        %v478 = vpop.f32.mrf.mxu0
        %v479 = vadd.f32 %v320, %v478
        %v480 = vpop.f32.mrf.mxu0
        %v481 = vadd.f32 %v320, %v480
        %482 = vmatmul.bf16.gmra.mxu0 %v389
        %v483 = vpop.f32.mrf.mxu0
        %v484 = vadd.f32 %v320, %v483
        %v485 = vpop.f32.mrf.mxu0
        %v486 = vadd.f32 %v320, %v485
        %487 = vmatmul.bf16.gmra.mxu0 %v392
        %v488 = vpop.f32.mrf.mxu0
        %v489 = vadd.f32 %v320, %v488
        %v490 = vpop.f32.mrf.mxu0
        %v491 = vadd.f32 %v320, %v490
        %492 = vmatmul.bf16.gmra.mxu0 %v395
        %v493 = vpop.f32.mrf.mxu0
        %v494 = vadd.f32 %v320, %v493
        %v495 = vpop.f32.mrf.mxu0
        %v496 = vadd.f32 %v320, %v495
        %497 = vmatmul.bf16.gmra.mxu0 %v398
        %v498 = vpop.f32.mrf.mxu0
        %v499 = vadd.f32 %v320, %v498
        %v500 = vpop.f32.mrf.mxu0
        %v501 = vadd.f32 %v320, %v500
        %502 = vmatmul.bf16.gmra.mxu0 %v401
        %v503 = vpop.f32.mrf.mxu0
        %v504 = vadd.f32 %v320, %v503
        %v505 = vpop.f32.mrf.mxu0
        %v506 = vadd.f32 %v320, %v505
        %507 = vdwg.mxu0
        %v508 = vmax.f32 %v420, 0.0
        %v509 = vmax.f32 %v469, 0.0
        %v510 = vmax.f32 %v422, 0.0
        %v511 = vmax.f32 %v471, 0.0
        %v512 = vmax.f32 %v425, 0.0
        %v513 = vmax.f32 %v474, 0.0
        %v514 = vmax.f32 %v427, 0.0
        %v515 = vmax.f32 %v476, 0.0
        %v516 = vmax.f32 %v430, 0.0
        %v517 = vmax.f32 %v479, 0.0
        %v518 = vmax.f32 %v432, 0.0
        %v519 = vmax.f32 %v481, 0.0
        %v520 = vmax.f32 %v435, 0.0
        %v521 = vmax.f32 %v484, 0.0
        %v522 = vmax.f32 %v437, 0.0
        %v523 = vmax.f32 %v486, 0.0
        %v524 = vmax.f32 %v440, 0.0
        %v525 = vmax.f32 %v489, 0.0
        %v526 = vmax.f32 %v442, 0.0
        %v527 = vmax.f32 %v491, 0.0
        %v528 = vmax.f32 %v445, 0.0
        %v529 = vmax.f32 %v494, 0.0
        %v530 = vmax.f32 %v447, 0.0
        %v531 = vmax.f32 %v496, 0.0
        %v532 = vmax.f32 %v450, 0.0
        %v533 = vmax.f32 %v499, 0.0
        %v534 = vmax.f32 %v452, 0.0
        %v535 = vmax.f32 %v501, 0.0
        %v536 = vmax.f32 %v455, 0.0
        %v537 = vmax.f32 %v504, 0.0
        %v538 = vmax.f32 %v457, 0.0
        %v539 = vmax.f32 %v506, 0.0
        %v540 = vpack.c.bf16 %v510, %v508
        %v541 = vpack.c.bf16 %v511, %v509
        %v542 = vpack.c.bf16 %v514, %v512
        %v543 = vpack.c.bf16 %v515, %v513
        %v544 = vpack.c.bf16 %v518, %v516
        %v545 = vpack.c.bf16 %v519, %v517
        %v546 = vpack.c.bf16 %v522, %v520
        %v547 = vpack.c.bf16 %v523, %v521
        %v548 = vpack.c.bf16 %v526, %v524
        %v549 = vpack.c.bf16 %v527, %v525
        %v550 = vpack.c.bf16 %v530, %v528
        %v551 = vpack.c.bf16 %v531, %v529
        %v552 = vpack.c.bf16 %v534, %v532
        %v553 = vpack.c.bf16 %v535, %v533
        %v554 = vpack.c.bf16 %v538, %v536
        %v555 = vpack.c.bf16 %v539, %v537
        %v556 = vld [vmem:[#allocation3] sm:$0xff]
        %v557 = vld [vmem:[#allocation3 + $0x8] sm:$0xff]
        %v558 = vld [vmem:[#allocation3 + $0x10] sm:$0xff]
        %v559 = vld [vmem:[#allocation3 + $0x18] sm:$0xff]
        %v560 = vld [vmem:[#allocation3 + $0x20] sm:$0xff]
        %v561 = vld [vmem:[#allocation3 + $0x28] sm:$0xff]
        %v562 = vld [vmem:[#allocation3 + $0x30] sm:$0xff]
        %v563 = vld [vmem:[#allocation3 + $0x38] sm:$0xff]
        %v564 = vld [vmem:[#allocation3 + $0x40] sm:$0xff]
        %v565 = vld [vmem:[#allocation3 + $0x48] sm:$0xff]
        %v566 = vld [vmem:[#allocation3 + $0x50] sm:$0xff]
        %v567 = vld [vmem:[#allocation3 + $0x58] sm:$0xff]
        %v568 = vld [vmem:[#allocation3 + $0x60] sm:$0xff]
        %v569 = vld [vmem:[#allocation3 + $0x68] sm:$0xff]
        %v570 = vld [vmem:[#allocation3 + $0x70] sm:$0xff]
        %v571 = vld [vmem:[#allocation3 + $0x78] sm:$0xff]
        %v572 = vld [vmem:[#allocation3 + $0x80] sm:$0xff]
        %v573 = vld [vmem:[#allocation3 + $0x88] sm:$0xff]
        %v574 = vld [vmem:[#allocation3 + $0x90] sm:$0xff]
        %v575 = vld [vmem:[#allocation3 + $0x98] sm:$0xff]
        %v576 = vld [vmem:[#allocation3 + $0xa0] sm:$0xff]
        %v577 = vld [vmem:[#allocation3 + $0xa8] sm:$0xff]
        %v578 = vld [vmem:[#allocation3 + $0xb0] sm:$0xff]
        %v579 = vld [vmem:[#allocation3 + $0xb8] sm:$0xff]
        %v580 = vld [vmem:[#allocation3 + $0xc0] sm:$0xff]
        %v581 = vld [vmem:[#allocation3 + $0xc8] sm:$0xff]
        %v582 = vld [vmem:[#allocation3 + $0xd0] sm:$0xff]
        %v583 = vld [vmem:[#allocation3 + $0xd8] sm:$0xff]
        %v584 = vld [vmem:[#allocation3 + $0xe0] sm:$0xff]
        %v585 = vld [vmem:[#allocation3 + $0xe8] sm:$0xff]
        %v586 = vld [vmem:[#allocation3 + $0xf0] sm:$0xff]
        %v587 = vld [vmem:[#allocation3 + $0xf8] sm:$0xff]
        %v588 = vld [vmem:[%s4] sm:$0x3]
        %v590 = vperm.slane %v588, 0
        %v591 = vperm.slane %v588, 1
        %v626 = vunpack.c.l.b16 %v556
        %v627 = vunpack.c.h.b16 %v556
        %v628 = vunpack.c.l.b16 %v557
        %v629 = vunpack.c.h.b16 %v557
        %v630 = vunpack.c.l.b16 %v558
        %v631 = vunpack.c.h.b16 %v558
        %v632 = vunpack.c.l.b16 %v559
        %v633 = vunpack.c.h.b16 %v559
        %v634 = vunpack.c.l.b16 %v560
        %v635 = vunpack.c.h.b16 %v560
        %v636 = vunpack.c.l.b16 %v561
        %v637 = vunpack.c.h.b16 %v561
        %v638 = vunpack.c.l.b16 %v562
        %v639 = vunpack.c.h.b16 %v562
        %v640 = vunpack.c.l.b16 %v563
        %v641 = vunpack.c.h.b16 %v563
        %v642 = vunpack.c.l.b16 %v564
        %v643 = vunpack.c.h.b16 %v564
        %v644 = vunpack.c.l.b16 %v565
        %v645 = vunpack.c.h.b16 %v565
        %v646 = vunpack.c.l.b16 %v566
        %v647 = vunpack.c.h.b16 %v566
        %v648 = vunpack.c.l.b16 %v567
        %v649 = vunpack.c.h.b16 %v567
        %v650 = vunpack.c.l.b16 %v568
        %v651 = vunpack.c.h.b16 %v568
        %v652 = vunpack.c.l.b16 %v569
        %v653 = vunpack.c.h.b16 %v569
        %v654 = vunpack.c.l.b16 %v570
        %v655 = vunpack.c.h.b16 %v570
        %v656 = vunpack.c.l.b16 %v571
        %v657 = vunpack.c.h.b16 %v571
        %v658 = vunpack.c.l.b16 %v572
        %v659 = vunpack.c.h.b16 %v572
        %v660 = vunpack.c.l.b16 %v573
        %v661 = vunpack.c.h.b16 %v573
        %v662 = vunpack.c.l.b16 %v574
        %v663 = vunpack.c.h.b16 %v574
        %v664 = vunpack.c.l.b16 %v575
        %v665 = vunpack.c.h.b16 %v575
        %v666 = vunpack.c.l.b16 %v576
        %v667 = vunpack.c.h.b16 %v576
        %v668 = vunpack.c.l.b16 %v577
        %v669 = vunpack.c.h.b16 %v577
        %v670 = vunpack.c.l.b16 %v578
        %v671 = vunpack.c.h.b16 %v578
        %v672 = vunpack.c.l.b16 %v579
        %v673 = vunpack.c.h.b16 %v579
        %v674 = vunpack.c.l.b16 %v580
        %v675 = vunpack.c.h.b16 %v580
        %v676 = vunpack.c.l.b16 %v581
        %v677 = vunpack.c.h.b16 %v581
        %v678 = vunpack.c.l.b16 %v582
        %v679 = vunpack.c.h.b16 %v582
        %v680 = vunpack.c.l.b16 %v583
        %v681 = vunpack.c.h.b16 %v583
        %v682 = vunpack.c.l.b16 %v584
        %v683 = vunpack.c.h.b16 %v584
        %v684 = vunpack.c.l.b16 %v585
        %v685 = vunpack.c.h.b16 %v585
        %v686 = vunpack.c.l.b16 %v586
        %v687 = vunpack.c.h.b16 %v586
        %v688 = vunpack.c.l.b16 %v587
        %v689 = vunpack.c.h.b16 %v587
        %v690 = vpack.c.b16 %v628, %v626
        %v691 = vpack.c.b16 %v629, %v627
        %v692 = vpack.c.b16 %v632, %v630
        %v693 = vpack.c.b16 %v633, %v631
        %v694 = vpack.c.b16 %v636, %v634
        %v695 = vpack.c.b16 %v637, %v635
        %v696 = vpack.c.b16 %v640, %v638
        %v697 = vpack.c.b16 %v641, %v639
        %v698 = vpack.c.b16 %v644, %v642
        %v699 = vpack.c.b16 %v645, %v643
        %v700 = vpack.c.b16 %v648, %v646
        %v701 = vpack.c.b16 %v649, %v647
        %v702 = vpack.c.b16 %v652, %v650
        %v703 = vpack.c.b16 %v653, %v651
        %v704 = vpack.c.b16 %v656, %v654
        %v705 = vpack.c.b16 %v657, %v655
        %v706 = vpack.c.b16 %v660, %v658
        %v707 = vpack.c.b16 %v661, %v659
        %v708 = vpack.c.b16 %v664, %v662
        %v709 = vpack.c.b16 %v665, %v663
        %v710 = vpack.c.b16 %v668, %v666
        %v711 = vpack.c.b16 %v669, %v667
        %v712 = vpack.c.b16 %v672, %v670
        %v713 = vpack.c.b16 %v673, %v671
        %v714 = vpack.c.b16 %v676, %v674
        %v715 = vpack.c.b16 %v677, %v675
        %v716 = vpack.c.b16 %v680, %v678
        %v717 = vpack.c.b16 %v681, %v679
        %v718 = vpack.c.b16 %v684, %v682
        %v719 = vpack.c.b16 %v685, %v683
        %v720 = vpack.c.b16 %v688, %v686
        %v721 = vpack.c.b16 %v689, %v687
        %754 = vmatpush.bf16.msra.mxu0 %v704
        %755 = vmatpush.bf16.msra.mxu0 %v702
        %756 = vmatpush.bf16.msra.mxu0 %v700
        %757 = vmatpush.bf16.msra.mxu0 %v698
        %758 = vmatpush.bf16.msra.mxu0 %v696
        %759 = vmatpush.bf16.msra.mxu0 %v694
        %760 = vmatpush.bf16.msra.mxu0 %v692
        %761 = vmatpush.bf16.msra.mxu0 %v690
        %762 = vmatmul.bf16.gmra.mxu0 %v540
        %v763 = vpop.f32.mrf.mxu0
        %v764 = vadd.f32 %v590, %v763
        %v765 = vpop.f32.mrf.mxu0
        %v766 = vadd.f32 %v590, %v765
        %767 = vmatmul.bf16.gmra.mxu0 %v542
        %v768 = vpop.f32.mrf.mxu0
        %v769 = vadd.f32 %v590, %v768
        %v770 = vpop.f32.mrf.mxu0
        %v771 = vadd.f32 %v590, %v770
        %772 = vmatmul.bf16.gmra.mxu0 %v544
        %v773 = vpop.f32.mrf.mxu0
        %v774 = vadd.f32 %v590, %v773
        %v775 = vpop.f32.mrf.mxu0
        %v776 = vadd.f32 %v590, %v775
        %777 = vmatmul.bf16.gmra.mxu0 %v546
        %v778 = vpop.f32.mrf.mxu0
        %v779 = vadd.f32 %v590, %v778
        %v780 = vpop.f32.mrf.mxu0
        %v781 = vadd.f32 %v590, %v780
        %782 = vmatmul.bf16.gmra.mxu0 %v548
        %v783 = vpop.f32.mrf.mxu0
        %v784 = vadd.f32 %v590, %v783
        %v785 = vpop.f32.mrf.mxu0
        %v786 = vadd.f32 %v590, %v785
        %787 = vmatmul.bf16.gmra.mxu0 %v550
        %v788 = vpop.f32.mrf.mxu0
        %v789 = vadd.f32 %v590, %v788
        %v790 = vpop.f32.mrf.mxu0
        %v791 = vadd.f32 %v590, %v790
        %792 = vmatmul.bf16.gmra.mxu0 %v552
        %v793 = vpop.f32.mrf.mxu0
        %v794 = vadd.f32 %v590, %v793
        %v795 = vpop.f32.mrf.mxu0
        %v796 = vadd.f32 %v590, %v795
        %797 = vmatmul.bf16.gmra.mxu0 %v554
        %v798 = vpop.f32.mrf.mxu0
        %v799 = vadd.f32 %v590, %v798
        %v800 = vpop.f32.mrf.mxu0
        %v801 = vadd.f32 %v590, %v800
        %802 = vdwg.mxu0
        %803 = vmatpush.bf16.msra.mxu0 %v720
        %804 = vmatpush.bf16.msra.mxu0 %v718
        %805 = vmatpush.bf16.msra.mxu0 %v716
        %806 = vmatpush.bf16.msra.mxu0 %v714
        %807 = vmatpush.bf16.msra.mxu0 %v712
        %808 = vmatpush.bf16.msra.mxu0 %v710
        %809 = vmatpush.bf16.msra.mxu0 %v708
        %810 = vmatpush.bf16.msra.mxu0 %v706
        %811 = vmatmul.bf16.gmra.mxu0 %v541
        %v812 = vpop.f32.mrf.mxu0
        %v813 = vadd.f32 %v764, %v812
        %v814 = vpop.f32.mrf.mxu0
        %v815 = vadd.f32 %v766, %v814
        %816 = vmatmul.bf16.gmra.mxu0 %v543
        %v817 = vpop.f32.mrf.mxu0
        %v818 = vadd.f32 %v769, %v817
        %v819 = vpop.f32.mrf.mxu0
        %v820 = vadd.f32 %v771, %v819
        %821 = vmatmul.bf16.gmra.mxu0 %v545
        %v822 = vpop.f32.mrf.mxu0
        %v823 = vadd.f32 %v774, %v822
        %v824 = vpop.f32.mrf.mxu0
        %v825 = vadd.f32 %v776, %v824
        %826 = vmatmul.bf16.gmra.mxu0 %v547
        %v827 = vpop.f32.mrf.mxu0
        %v828 = vadd.f32 %v779, %v827
        %v829 = vpop.f32.mrf.mxu0
        %v830 = vadd.f32 %v781, %v829
        %831 = vmatmul.bf16.gmra.mxu0 %v549
        %v832 = vpop.f32.mrf.mxu0
        %v833 = vadd.f32 %v784, %v832
        %v834 = vpop.f32.mrf.mxu0
        %v835 = vadd.f32 %v786, %v834
        %836 = vmatmul.bf16.gmra.mxu0 %v551
        %v837 = vpop.f32.mrf.mxu0
        %v838 = vadd.f32 %v789, %v837
        %v839 = vpop.f32.mrf.mxu0
        %v840 = vadd.f32 %v791, %v839
        %841 = vmatmul.bf16.gmra.mxu0 %v553
        %v842 = vpop.f32.mrf.mxu0
        %v843 = vadd.f32 %v794, %v842
        %v844 = vpop.f32.mrf.mxu0
        %v845 = vadd.f32 %v796, %v844
        %846 = vmatmul.bf16.gmra.mxu0 %v555
        %v847 = vpop.f32.mrf.mxu0
        %v848 = vadd.f32 %v799, %v847
        %v849 = vpop.f32.mrf.mxu0
        %v850 = vadd.f32 %v801, %v849
        %851 = vdwg.mxu0
        %852 = vmatpush.bf16.msra.mxu0 %v705
        %853 = vmatpush.bf16.msra.mxu0 %v703
        %854 = vmatpush.bf16.msra.mxu0 %v701
        %855 = vmatpush.bf16.msra.mxu0 %v699
        %856 = vmatpush.bf16.msra.mxu0 %v697
        %857 = vmatpush.bf16.msra.mxu0 %v695
        %858 = vmatpush.bf16.msra.mxu0 %v693
        %859 = vmatpush.bf16.msra.mxu0 %v691
        %860 = vmatmul.bf16.gmra.mxu0 %v540
        %v861 = vpop.f32.mrf.mxu0
        %v862 = vadd.f32 %v591, %v861
        %v863 = vpop.f32.mrf.mxu0
        %v864 = vadd.f32 %v591, %v863
        %865 = vmatmul.bf16.gmra.mxu0 %v542
        %v866 = vpop.f32.mrf.mxu0
        %v867 = vadd.f32 %v591, %v866
        %v868 = vpop.f32.mrf.mxu0
        %v869 = vadd.f32 %v591, %v868
        %870 = vmatmul.bf16.gmra.mxu0 %v544
        %v871 = vpop.f32.mrf.mxu0
        %v872 = vadd.f32 %v591, %v871
        %v873 = vpop.f32.mrf.mxu0
        %v874 = vadd.f32 %v591, %v873
        %875 = vmatmul.bf16.gmra.mxu0 %v546
        %v876 = vpop.f32.mrf.mxu0
        %v877 = vadd.f32 %v591, %v876
        %v878 = vpop.f32.mrf.mxu0
        %v879 = vadd.f32 %v591, %v878
        %880 = vmatmul.bf16.gmra.mxu0 %v548
        %v881 = vpop.f32.mrf.mxu0
        %v882 = vadd.f32 %v591, %v881
        %v883 = vpop.f32.mrf.mxu0
        %v884 = vadd.f32 %v591, %v883
        %885 = vmatmul.bf16.gmra.mxu0 %v550
        %v886 = vpop.f32.mrf.mxu0
        %v887 = vadd.f32 %v591, %v886
        %v888 = vpop.f32.mrf.mxu0
        %v889 = vadd.f32 %v591, %v888
        %890 = vmatmul.bf16.gmra.mxu0 %v552
        %v891 = vpop.f32.mrf.mxu0
        %v892 = vadd.f32 %v591, %v891
        %v893 = vpop.f32.mrf.mxu0
        %v894 = vadd.f32 %v591, %v893
        %895 = vmatmul.bf16.gmra.mxu0 %v554
        %v896 = vpop.f32.mrf.mxu0
        %v897 = vadd.f32 %v591, %v896
        %v898 = vpop.f32.mrf.mxu0
        %v899 = vadd.f32 %v591, %v898
        %900 = vdwg.mxu0
        %901 = vmatpush.bf16.msra.mxu0 %v721
        %902 = vmatpush.bf16.msra.mxu0 %v719
        %903 = vmatpush.bf16.msra.mxu0 %v717
        %904 = vmatpush.bf16.msra.mxu0 %v715
        %905 = vmatpush.bf16.msra.mxu0 %v713
        %906 = vmatpush.bf16.msra.mxu0 %v711
        %907 = vmatpush.bf16.msra.mxu0 %v709
        %908 = vmatpush.bf16.msra.mxu0 %v707
        %909 = vmatmul.bf16.gmra.mxu0 %v541
        %v910 = vpop.f32.mrf.mxu0
        %v911 = vadd.f32 %v862, %v910
        %v912 = vpop.f32.mrf.mxu0
        %v913 = vadd.f32 %v864, %v912
        %914 = vmatmul.bf16.gmra.mxu0 %v543
        %v915 = vpop.f32.mrf.mxu0
        %v916 = vadd.f32 %v867, %v915
        %v917 = vpop.f32.mrf.mxu0
        %v918 = vadd.f32 %v869, %v917
        %919 = vmatmul.bf16.gmra.mxu0 %v545
        %v920 = vpop.f32.mrf.mxu0
        %v921 = vadd.f32 %v872, %v920
        %v922 = vpop.f32.mrf.mxu0
        %v923 = vadd.f32 %v874, %v922
        %924 = vmatmul.bf16.gmra.mxu0 %v547
        %v925 = vpop.f32.mrf.mxu0
        %v926 = vadd.f32 %v877, %v925
        %v927 = vpop.f32.mrf.mxu0
        %v928 = vadd.f32 %v879, %v927
        %929 = vmatmul.bf16.gmra.mxu0 %v549
        %v930 = vpop.f32.mrf.mxu0
        %v931 = vadd.f32 %v882, %v930
        %v932 = vpop.f32.mrf.mxu0
        %v933 = vadd.f32 %v884, %v932
        %934 = vmatmul.bf16.gmra.mxu0 %v551
        %v935 = vpop.f32.mrf.mxu0
        %v936 = vadd.f32 %v887, %v935
        %v937 = vpop.f32.mrf.mxu0
        %v938 = vadd.f32 %v889, %v937
        %939 = vmatmul.bf16.gmra.mxu0 %v553
        %v940 = vpop.f32.mrf.mxu0
        %v941 = vadd.f32 %v892, %v940
        %v942 = vpop.f32.mrf.mxu0
        %v943 = vadd.f32 %v894, %v942
        %944 = vmatmul.bf16.gmra.mxu0 %v555
        %v945 = vpop.f32.mrf.mxu0
        %v946 = vadd.f32 %v897, %v945
        %v947 = vpop.f32.mrf.mxu0
        %v948 = vadd.f32 %v899, %v947
        %949 = vdwg.mxu0
        %v950 = vmax.f32 %v813, 0.0
        %v951 = vmax.f32 %v911, 0.0
        %v952 = vmax.f32 %v815, 0.0
        %v953 = vmax.f32 %v913, 0.0
        %v954 = vmax.f32 %v818, 0.0
        %v955 = vmax.f32 %v916, 0.0
        %v956 = vmax.f32 %v820, 0.0
        %v957 = vmax.f32 %v918, 0.0
        %v958 = vmax.f32 %v823, 0.0
        %v959 = vmax.f32 %v921, 0.0
        %v960 = vmax.f32 %v825, 0.0
        %v961 = vmax.f32 %v923, 0.0
        %v962 = vmax.f32 %v828, 0.0
        %v963 = vmax.f32 %v926, 0.0
        %v964 = vmax.f32 %v830, 0.0
        %v965 = vmax.f32 %v928, 0.0
        %v966 = vmax.f32 %v833, 0.0
        %v967 = vmax.f32 %v931, 0.0
        %v968 = vmax.f32 %v835, 0.0
        %v969 = vmax.f32 %v933, 0.0
        %v970 = vmax.f32 %v838, 0.0
        %v971 = vmax.f32 %v936, 0.0
        %v972 = vmax.f32 %v840, 0.0
        %v973 = vmax.f32 %v938, 0.0
        %v974 = vmax.f32 %v843, 0.0
        %v975 = vmax.f32 %v941, 0.0
        %v976 = vmax.f32 %v845, 0.0
        %v977 = vmax.f32 %v943, 0.0
        %v978 = vmax.f32 %v848, 0.0
        %v979 = vmax.f32 %v946, 0.0
        %v980 = vmax.f32 %v850, 0.0
        %v981 = vmax.f32 %v948, 0.0
        %v982 = vpack.c.bf16 %v952, %v950
        %v983 = vpack.c.bf16 %v953, %v951
        %v984 = vpack.c.bf16 %v956, %v954
        %v985 = vpack.c.bf16 %v957, %v955
        %v986 = vpack.c.bf16 %v960, %v958
        %v987 = vpack.c.bf16 %v961, %v959
        %v988 = vpack.c.bf16 %v964, %v962
        %v989 = vpack.c.bf16 %v965, %v963
        %v990 = vpack.c.bf16 %v968, %v966
        %v991 = vpack.c.bf16 %v969, %v967
        %v992 = vpack.c.bf16 %v972, %v970
        %v993 = vpack.c.bf16 %v973, %v971
        %v994 = vpack.c.bf16 %v976, %v974
        %v995 = vpack.c.bf16 %v977, %v975
        %v996 = vpack.c.bf16 %v980, %v978
        %v997 = vpack.c.bf16 %v981, %v979
        %v998 = vld [vmem:[%s5] sm:$0x3]
        %v999 = vld [vmem:[#allocation2] sm:$0x1]
        %1001 = vset.pattern.permute.xlu0 0
        %1002 = vperm.xlu0 %1001, %v999
        %v1003 = vpop.permute.xlu0 %1002
        %v1005 = vperm.slane %v1003, 0
        %1007 = vst [vmem:[#allocation1] ss:$9 sm:$0xff] %v998
        %v1008 = vld [vmem:[#allocation1] sm:$0xff]
        %v1009 = vld [vmem:[#allocation1 + $0x9] sm:$0xff]
        %1012 = vmatpush.bf16.xpose.msra.mxu0 %v996
        %1013 = vmatpush.bf16.xpose.msra.mxu0 %v994
        %1014 = vmatpush.bf16.xpose.msra.mxu0 %v992
        %1015 = vmatpush.bf16.xpose.msra.mxu0 %v990
        %1016 = vmatpush.bf16.xpose.msra.mxu0 %v988
        %1017 = vmatpush.bf16.xpose.msra.mxu0 %v986
        %1018 = vmatpush.bf16.xpose.msra.mxu0 %v984
        %1019 = vmatpush.bf16.xpose.msra.mxu0 %v982
        %1020 = vmatmul.bf16.gmra.mxu0 %v1008
        %v1021 = vpop.f32.mrf.mxu0
        %v1022 = vadd.f32 %v1005, %v1021
        %v1023 = vpop.f32.mrf.mxu0
        %1024 = vdwg.mxu0
        %1025 = vmatpush.bf16.xpose.msra.mxu0 %v997
        %1026 = vmatpush.bf16.xpose.msra.mxu0 %v995
        %1027 = vmatpush.bf16.xpose.msra.mxu0 %v993
        %1028 = vmatpush.bf16.xpose.msra.mxu0 %v991
        %1029 = vmatpush.bf16.xpose.msra.mxu0 %v989
        %1030 = vmatpush.bf16.xpose.msra.mxu0 %v987
        %1031 = vmatpush.bf16.xpose.msra.mxu0 %v985
        %1032 = vmatpush.bf16.xpose.msra.mxu0 %v983
        %1033 = vmatmul.bf16.gmra.mxu0 %v1009
        %v1034 = vpop.f32.mrf.mxu0
        %v1035 = vadd.f32 %v1022, %v1034
        %v1036 = vpop.f32.mrf.mxu0
        %1037 = vdwg.mxu0
        %1038 = vst [vmem:[%s290] sm:$0x1] %v1035
        %s1039 = sand.u32 %s184, 1
        %s1040 = scalar_lea.sflag [#allocation5], %s1039
        %s1041 = sand.u32 %s184, 1
        %s1042 = scalar_lea.vmem [#allocation6], %s1041
        // Predicated region
        $region53: #{tpu_custom_call.1} parent=47 // pred_check
          %p1043 = pneg %p194
        $region54: #{tpu_custom_call.1} parent=47 // pred_check_branch
          %1045 = sbr.rel (%p1043) target = $region56
        $region55: #{tpu_custom_call.1} parent=47 // pred_region
          %1047 = vsyncadd %s1040, 0
          %s1048 = scalar_lea.hbm %s7, %s24
          %s1050 = sshll.u32 %s1042, 4
          %s1051 = int_to_ptr.vmem [resolvable:$true] %s1050
          %s1052 = sshll.u32 %s1048, 4
          %s1053 = int_to_ptr.hbm [resolvable:$true] %s1052
          %1055 = dma.vmem_to_hbm [thread:$0]  %s1051, 16, %s1053, %s1040
        $region56: #{tpu_custom_call.1} parent=47 // pred_fallthru
          _
      $region48: #{tpu_custom_call.1} parent=5 // pred_fallthru
        _
      %p1056 = scmp.le.s32.totalorder 2, %s19
      // Predicated region
      $region57: #{tpu_custom_call.1} parent=5 // pred_check
        %p1057 = pneg %p1056
      $region58: #{tpu_custom_call.1} parent=5 // pred_check_branch
        %1059 = sbr.rel (%p1057) target = $region60
      $region59: #{tpu_custom_call.1} parent=5 // pred_region
        %s1060 = ssub.s32 %s19, 2
        // Predicated region
        $region61: #{tpu_custom_call.1} parent=59 // pred_check
          %p1061 = pneg %p200
        $region62: #{tpu_custom_call.1} parent=59 // pred_check_branch
          %1063 = sbr.rel (%p1061) target = $region64
        $region63: #{tpu_custom_call.1} parent=59 // pred_region
          %s1064 = sand.u32 %s185, 1
          %s1065 = scalar_lea.sflag [#allocation5], %s1064
          %s1066 = sand.u32 %s185, 1
          %s1067 = scalar_lea.vmem [#allocation6], %s1066
          %1069 = dma.done %s1065, 16
        $region64: #{tpu_custom_call.1} parent=59 // pred_fallthru
          _
      $region60: #{tpu_custom_call.1} parent=5 // pred_fallthru
        _
    $region6: #{tpu_custom_call.1} parent=1 // loop_footer
      %s23 = sadd.s32 1, %s19
    $region7: #{tpu_custom_call.1} parent=1 // loop_footer_branch
      %18 = sbr.rel target = $region3
    $region8: #{tpu_custom_call.1} parent=1 // loop_exit
      _
    %1070 = vsyncpa [#allocation4], 1
    %s1071 = scalar_lea.sflag [#allocation4], 1
    %1072 = vsyncpa %s1071, 1
    %1073 = vsyncpa [#allocation5], 1
    %s1074 = scalar_lea.sflag [#allocation5], 1
    %1075 = vsyncpa %s1074, 1

</llo_original>
